<compile_context>
chip_gen: v7x
topology: tpu7x:2x2x1
jax: 0.10.0
libtpu: 0.0.40
codegen_flags: <defaults>
</compile_context>

<pallas_src>
import math

import numpy as np
import jax
import jax.numpy as jnp
from jax.experimental import pallas as pl
from jax.experimental.pallas import tpu as pltpu

_VMEM_LIMIT = 32 * 1024 * 1024  # conservative scoped-VMEM cap (fits v5e/v6e/v7x)


def _round_up(x, m):
    return ((x + m - 1) // m) * m


def _pad2d(x, rows, cols, dtype):
    """Pad/cast a 2-D array; no-op when already the right shape & dtype."""
    x = x.astype(dtype)
    if x.shape == (rows, cols):
        return x
    return jnp.zeros((rows, cols), dtype).at[:x.shape[0], :x.shape[1]].set(x)


# ---------------------------------------------------------------------------
# Tiled linear:  act(a @ b + bias)   (accumulates directly into the f32 output)
# ---------------------------------------------------------------------------
def _make_linear_kernel(act, neg_slope):
    def kernel(a_ref, b_ref, bias_ref, o_ref):
        @pl.when(pl.program_id(2) == 0)
        def _():
            o_ref[...] = jnp.zeros_like(o_ref)

        o_ref[...] += jnp.dot(a_ref[...], b_ref[...],
                              preferred_element_type=jnp.float32)

        @pl.when(pl.program_id(2) == pl.num_programs(2) - 1)
        def _():
            x = o_ref[...] + bias_ref[...]
            if act == "relu":
                x = jnp.maximum(x, 0.0)
            elif act == "leaky_relu":
                x = jnp.where(x > 0, x, neg_slope * x)
            o_ref[...] = x
    return kernel


def linear_pallas(a, b, bias, act="none", neg_slope=0.01,
                  tm=256, tn=256, tk=512):
    """Tiled, pipelined matmul: bf16 operands on the MXU, f32 accumulation."""
    M, K = a.shape
    K2, N = b.shape
    assert K == K2
    tm = min(tm, _round_up(M, 16))
    tn = min(tn, _round_up(N, 128))
    tk = min(tk, _round_up(K, 128))
    Mp, Np, Kp = _round_up(M, tm), _round_up(N, tn), _round_up(K, tk)

    a_p = _pad2d(a, Mp, Kp, jnp.bfloat16)
    b_p = _pad2d(b, Kp, Np, jnp.bfloat16)
    bias_p = _pad2d(bias.reshape(1, -1), 1, Np, jnp.float32)

    grid = (Mp // tm, Np // tn, Kp // tk)
    out = pl.pallas_call(
        _make_linear_kernel(act, neg_slope),
        out_shape=jax.ShapeDtypeStruct((Mp, Np), jnp.float32),
        grid=grid,
        in_specs=[
            pl.BlockSpec((tm, tk), lambda i, j, k: (i, k)),
            pl.BlockSpec((tk, tn), lambda i, j, k: (k, j)),
            pl.BlockSpec((1, tn), lambda i, j, k: (0, j)),
        ],
        out_specs=pl.BlockSpec((tm, tn), lambda i, j, k: (i, j)),
        compiler_params=pltpu.CompilerParams(
            dimension_semantics=("parallel", "parallel", "arbitrary"),
            vmem_limit_bytes=_VMEM_LIMIT),
    )(a_p, b_p, bias_p)
    return out[:M, :N]


# ---------------------------------------------------------------------------
# GATv2 attention, flash-style, heads folded into the kernel body
# ---------------------------------------------------------------------------
def _make_gat_kernel(heads, F, td, ts, neg_slope):
    HF = heads * F

    def kernel(adj_ref, s_t_ref, d_ref, attn_ref, bias_ref, o_ref,
               m_ref, l_ref, acc_ref):
        j = pl.program_id(1)

        @pl.when(j == 0)
        def _():
            m_ref[...] = jnp.full_like(m_ref, -1e30)
            l_ref[...] = jnp.zeros_like(l_ref)
            acc_ref[...] = jnp.zeros_like(acc_ref)

        mask = adj_ref[...] > 0                                    # (td, ts)

        m_cols, l_cols, corr_cols, pv_cols = [], [], [], []
        for h in range(heads):
            # GATv2 score built per feature on full (td, ts) lane-dense tiles:
            #   e[i,j] = sum_f a_f * leaky_relu(d[i,f] + s[j,f])
            e = jnp.zeros((td, ts), jnp.float32)
            for f in range(F):
                col = h * F + f
                d_f = d_ref[:, col:col + 1]                        # (td, 1) f32
                s_f = s_t_ref[col:col + 1, :].astype(jnp.float32)  # (1, ts)
                z = d_f + s_f
                z = jnp.where(z > 0, z, neg_slope * z)
                e = e + attn_ref[col] * z                          # SMEM scalar
            e = jnp.where(mask, e, -1e30)

            # online masked softmax over source tiles (per head)
            m_prev = m_ref[:, h:h + 1]
            m_new = jnp.maximum(m_prev, jnp.max(e, axis=-1, keepdims=True))
            corr = jnp.exp(m_prev - m_new)
            p = jnp.where(mask, jnp.exp(e - m_new), 0.0)
            l_new = corr * l_ref[:, h:h + 1] + jnp.sum(p, axis=-1, keepdims=True)

            # PV: (td, ts) x (F, ts) contracted over ts  -> (td, F) on the MXU
            pv = jax.lax.dot_general(
                p.astype(jnp.bfloat16), s_t_ref[h * F:(h + 1) * F, :],
                (((1,), (1,)), ((), ())),
                preferred_element_type=jnp.float32)

            m_cols.append(m_new)
            l_cols.append(l_new)
            corr_cols.append(jnp.broadcast_to(corr, (td, F)))
            pv_cols.append(pv)

        m_ref[...] = jnp.concatenate(m_cols, axis=1)
        l_ref[...] = jnp.concatenate(l_cols, axis=1)
        corr_full = jnp.concatenate(corr_cols, axis=1)             # (td, HF)
        acc_ref[...] = corr_full * acc_ref[...] + jnp.concatenate(pv_cols, axis=1)

        @pl.when(j == pl.num_programs(1) - 1)
        def _():
            # guard zero-degree rows; reciprocal on the EUP slot
            inv_l = pl.reciprocal(jnp.maximum(l_ref[...], 1e-20), approx=True)
            inv_full = jnp.concatenate(
                [jnp.broadcast_to(inv_l[:, h:h + 1], (td, F))
                 for h in range(heads)], axis=1)
            o_ref[...] = acc_ref[...] * inv_full + bias_ref[...]
    return kernel


def gatv2_flash(h, w_src, w_dst, attn, bias, adj_i8, heads, out_feats, neg_slope):
    """Dense-mask DGL-style GATv2Conv.  Returns lane-dense (N, heads*out_feats)."""
    N = h.shape[0]
    F = out_feats
    HF = heads * F
    zeros = jnp.zeros((HF,), jnp.float32)
    s = linear_pallas(h, w_src, zeros)          # (N, HF) projected sources
    d = linear_pallas(h, w_dst, zeros)          # (N, HF) projected destinations

    if N <= 128:
        td = ts = _round_up(N, 8)
    else:
        td = ts = 128
    Np = _round_up(N, td)

    # bf16 transposed sources (re-streamed per dst tile), f32 destinations
    s_t = jnp.zeros((HF, Np), jnp.bfloat16).at[:, :N].set(s.T.astype(jnp.bfloat16))
    d_p = jnp.zeros((Np, HF), jnp.float32).at[:N].set(d)
    adj_p = jnp.zeros((Np, Np), jnp.int8).at[:N, :N].set(adj_i8.astype(jnp.int8))
    attn_flat = attn.reshape(HF).astype(jnp.float32)
    bias_row = bias.reshape(1, HF).astype(jnp.float32)

    grid = (Np // td, Np // ts)
    out = pl.pallas_call(
        _make_gat_kernel(heads, F, td, ts, neg_slope),
        out_shape=jax.ShapeDtypeStruct((Np, HF), jnp.float32),
        grid=grid,
        in_specs=[
            pl.BlockSpec((td, ts), lambda i, j: (i, j)),            # adjacency
            pl.BlockSpec((HF, ts), lambda i, j: (0, j)),            # src^T (bf16)
            pl.BlockSpec((td, HF), lambda i, j: (i, 0)),            # dst (resident)
            pl.BlockSpec(memory_space=pltpu.MemorySpace.SMEM),      # attn scalars
            pl.BlockSpec((1, HF), lambda i, j: (0, 0)),             # output bias
        ],
        out_specs=pl.BlockSpec((td, HF), lambda i, j: (i, 0)),
        scratch_shapes=[pltpu.VMEM((td, heads), jnp.float32),       # running max
                        pltpu.VMEM((td, heads), jnp.float32),       # running denom
                        pltpu.VMEM((td, HF), jnp.float32)],         # running numer
        compiler_params=pltpu.CompilerParams(
            dimension_semantics=("parallel", "arbitrary"),
            vmem_limit_bytes=_VMEM_LIMIT),
    )(adj_p, s_t, d_p, attn_flat, bias_row)
    return out[:N]                               # (N, heads*F), lane-dense


# ---------------------------------------------------------------------------
# Multi-scale CNN bank folded into one banded dense matrix (exact rewrite)
# ---------------------------------------------------------------------------
def conv_bank_to_dense(conv_raw, heads, F, ks=(1, 4, 16, 32)):
    """Fold Conv2d(1->6,(heads,k)) for all k into one (heads*F, 6*sum(W_out)) matrix.

    (x_flat @ B + bias) reproduces the PyTorch Conv2d+Flatten outputs exactly
    (channel-major, then width), so the whole CNN stage is one lane-dense matmul.
    """
    blocks, biases = [], []
    for k in ks:
        w, b = conv_raw[k]
        w = np.asarray(w, np.float32).reshape(6, heads, k)
        b = np.asarray(b, np.float32)
        W_out = F - k + 1
        Bm = np.zeros((heads, F, 6, W_out), np.float32)
        for c in range(6):
            for hh in range(heads):
                for dk in range(k):
                    for wpos in range(W_out):
                        Bm[hh, wpos + dk, c, wpos] = w[c, hh, dk]
        blocks.append(Bm.reshape(heads * F, 6 * W_out))
        biases.append(np.repeat(b, W_out))
    return jnp.asarray(np.concatenate(blocks, axis=1)), \
        jnp.asarray(np.concatenate(biases))


# ---------------------------------------------------------------------------
# Fused pair-MLP: pair features built with a broadcast-add, never hit HBM
# ---------------------------------------------------------------------------
def _make_pair_mlp_kernel(tc, ndp, neg_slope):
    rows = tc * ndp

    def kernel(a_ref, b_ref, b1_ref, w2_ref, b2_ref, w3_ref, b3_ref, w4_ref, o_ref):
        # layer-1 pair activations: leaky(A[ci] + B[dj] + b1) for every (ci, dj),
        # built with a VPU broadcast-add (no selector matmuls, no pair matrix).
        a = a_ref[...]                                   # (tc, d1p) f32
        b = b_ref[...]                                   # (ndp, d1p) f32
        h = (a[:, None, :] + b[None, :, :]).reshape(rows, -1) + b1_ref[...]
        h = jnp.where(h > 0, h, neg_slope * h)
        h = jnp.dot(h.astype(jnp.bfloat16), w2_ref[...],
                    preferred_element_type=jnp.float32) + b2_ref[...]
        h = jnp.where(h > 0, h, neg_slope * h)
        h = jnp.dot(h.astype(jnp.bfloat16), w3_ref[...],
                    preferred_element_type=jnp.float32) + b3_ref[...]
        h = jnp.where(h > 0, h, neg_slope * h)
        # final layer emitted lane-dense: (1, d3p) x (rows, d3p) -> (1, rows)
        logit = jax.lax.dot_general(
            w4_ref[...], h, (((1,), (1,)), ((), ())),
            preferred_element_type=jnp.float32)
        ex = jnp.exp(-jnp.abs(logit))                    # stable sigmoid
        sig = jnp.where(logit >= 0, 1.0 / (1.0 + ex), ex / (1.0 + ex))
        o_ref[...] = sig[None]
    return kernel


def pair_mlp_pallas(circ_emb, dis_emb, mlp_params, neg_slope=0.01):
    (w1, b1), (w2, b2), (w3, b3), (w4,) = mlp_params
    Nc, cnn_dim = circ_emb.shape
    Nd = dis_emb.shape[0]
    d1, d2, d3 = w1.shape[1], w2.shape[1], w3.shape[1]
    d1p, d2p, d3p = (_round_up(x, 128) for x in (d1, d2, d3))

    # layer-1 split: concat(c, d) @ w1 == c @ w1[:cnn_dim] + d @ w1[cnn_dim:]
    A = linear_pallas(circ_emb, w1[:cnn_dim], jnp.zeros((d1,), jnp.float32))
    B = linear_pallas(dis_emb, w1[cnn_dim:], jnp.zeros((d1,), jnp.float32))

    # rows per grid step: multiple of 128 lanes, ~512 rows to amortize overhead.
    # TODO(synk): for very large disease counts, Nd should also be tiled.
    ndp = _round_up(Nd, 8)
    step = 128 // math.gcd(ndp, 128)
    tc = _round_up(max(1, min(512 // ndp, Nc)), step)
    Ncp = _round_up(Nc, tc)
    rows = tc * ndp
    nblk = Ncp // tc

    A_p = _pad2d(A, Ncp, d1p, jnp.float32)
    B_p = _pad2d(B, ndp, d1p, jnp.float32)
    b1_p = _pad2d(b1.reshape(1, -1), 1, d1p, jnp.float32)
    w2_p = _pad2d(w2, d1p, d2p, jnp.bfloat16)
    b2_p = _pad2d(b2.reshape(1, -1), 1, d2p, jnp.float32)
    w3_p = _pad2d(w3, d2p, d3p, jnp.bfloat16)
    b3_p = _pad2d(b3.reshape(1, -1), 1, d3p, jnp.float32)
    w4_r = _pad2d(w4.reshape(1, -1), 1, d3p, jnp.float32)

    out = pl.pallas_call(
        _make_pair_mlp_kernel(tc, ndp, neg_slope),
        out_shape=jax.ShapeDtypeStruct((nblk, 1, rows), jnp.float32),
        grid=(nblk,),
        in_specs=[
            pl.BlockSpec((tc, d1p), lambda i: (i, 0)),     # A tile (streamed)
            pl.BlockSpec((ndp, d1p), lambda i: (0, 0)),    # B (resident)
            pl.BlockSpec((1, d1p), lambda i: (0, 0)),
            pl.BlockSpec((d1p, d2p), lambda i: (0, 0)),    # weights resident
            pl.BlockSpec((1, d2p), lambda i: (0, 0)),
            pl.BlockSpec((d2p, d3p), lambda i: (0, 0)),
            pl.BlockSpec((1, d3p), lambda i: (0, 0)),
            pl.BlockSpec((1, d3p), lambda i: (0, 0)),
        ],
        out_specs=pl.BlockSpec((1, 1, rows), lambda i: (i, 0, 0)),
        compiler_params=pltpu.CompilerParams(
            dimension_semantics=("parallel",),
            vmem_limit_bytes=_VMEM_LIMIT),
    )(A_p, B_p, b1_p, w2_p, b2_p, w3_p, b3_p, w4_r)

    return out.reshape(Ncp, ndp)[:Nc, :Nd].reshape(Nc * Nd, 1)


# ---------------------------------------------------------------------------
# Full forward pass (test path == train_model=False)
# ---------------------------------------------------------------------------
def gatcnnmf_forward(params, circ_feat, dis_feat, rel_matrix, adj_i8,
                     heads, out_feats, negative_slope):
    Nc = circ_feat.shape[0]
    F = out_feats

    # 1) input feature projections
    circ_f = linear_pallas(circ_feat, params["W_rna"], jnp.zeros((F,), jnp.float32))
    dis_f = linear_pallas(dis_feat, params["W_dis"], jnp.zeros((F,), jnp.float32))
    h = jnp.concatenate([circ_f, dis_f], axis=0)                   # (N, F)

    # 2) GATv2 attention (flash-style, heads folded, lane-dense output)
    res = gatv2_flash(h, params["gat_w_src"], params["gat_w_dst"],
                      params["gat_attn"], params["gat_bias"], adj_i8,
                      heads, F, negative_slope)                    # (N, heads*F)

    # 3) multi-scale CNN bank == a single lane-dense banded matmul + ReLU
    cnn_outputs = linear_pallas(res, params["conv_B"], params["conv_bias"],
                                act="relu")                         # (N, 6*sum(W_out))

    # 4) pair features built on the fly inside the fused MLP kernel
    # TODO(synk): train_features_choose (random negative sampling, train path) is
    # not implemented; only the deterministic test path is provided. Dropout is
    # identity at inference time.
    circ_emb = cnn_outputs[:Nc]
    dis_emb = cnn_outputs[Nc:]
    pred = pair_mlp_pallas(circ_emb, dis_emb, params["mlp"])
    labels = rel_matrix.reshape(-1, 1)
    return pred, labels


# ---------------------------------------------------------------------------
# Deterministic parameter construction
# ---------------------------------------------------------------------------
def xavier_uniform(key, shape, gain=1.0):
    fan_in, fan_out = shape
    a = gain * jnp.sqrt(6.0 / (fan_in + fan_out))
    return jax.random.uniform(key, shape, jnp.float32, -a, a)


def build_params(key, in_circ, in_dis, out_feats, heads, feat_emb_size):
    ks = jax.random.split(key, 24)
    F = out_feats
    params = {
        "W_rna": xavier_uniform(ks[0], (in_circ, F), gain=1.414),
        "W_dis": xavier_uniform(ks[1], (in_dis, F), gain=1.414),
        # DGL GATv2Conv: fc_src / fc_dst (F -> heads*F, no bias), attn (heads, F),
        # output bias (heads*F,)
        "gat_w_src": xavier_uniform(ks[2], (F, heads * F)),
        "gat_w_dst": xavier_uniform(ks[3], (F, heads * F)),
        "gat_attn": xavier_uniform(ks[4], (heads, F)),
        "gat_bias": jnp.zeros((heads * F,), jnp.float32),
    }
    # conv layers: nn.init.uniform_ (U[0,1]) on weights, zero bias
    conv_raw = {}
    for i, k in enumerate((1, 4, 16, 32)):
        w = jax.random.uniform(ks[5 + i], (6, heads, k), jnp.float32)
        conv_raw[k] = (w, jnp.zeros((6,), jnp.float32))
    params["conv_B"], params["conv_bias"] = conv_bank_to_dense(conv_raw, heads, F)
    # MLP: E -> E/2 -> E/4 -> E/6 -> 1 (last layer no bias), stored as (in, out)
    E = feat_emb_size
    d1, d2, d3 = E // 2, E // 4, E // 6
    params["mlp"] = (
        (xavier_uniform(ks[10], (E, d1)), jnp.zeros((d1,), jnp.float32)),
        (xavier_uniform(ks[11], (d1, d2)), jnp.zeros((d2,), jnp.float32)),
        (xavier_uniform(ks[12], (d2, d3)), jnp.zeros((d3,), jnp.float32)),
        (xavier_uniform(ks[13], (d3, 1)),),
    )
    return params


# ---------------------------------------------------------------------------
if __name__ == "__main__":
    key = jax.random.PRNGKey(0)
    kin = jax.random.split(key, 8)

    # small, module-consistent shapes
    in_circfeat_size = 64
    in_disfeat_size = 48
    outfeature_size = 32          # must be >= 32 for the (heads, 32) conv kernel
    heads = 4
    negative_slope = 0.2
    Nc, Nd = 24, 8
    N = Nc + Nd

    cnn_dim = 6 * sum(outfeature_size - k + 1 for k in (1, 4, 16, 32))
    features_embedding_size = 2 * cnn_dim   # = 948 for outfeature_size=32

    circ_feature_tensor = jax.random.normal(kin[0], (Nc, in_circfeat_size), jnp.float32)
    dis_feature_tensor = jax.random.normal(kin[1], (Nd, in_disfeat_size), jnp.float32)
    rel_matrix = (jax.random.uniform(kin[2], (Nc, Nd)) < 0.3).astype(jnp.float32)

    # dense adjacency mask standing in for the DGL graph (with self loops), int8
    adj = jax.random.uniform(kin[3], (N, N)) < 0.3
    adj = jnp.logical_or(adj, jnp.eye(N, dtype=bool)).astype(jnp.int8)

    params = build_params(kin[4], in_circfeat_size, in_disfeat_size,
                          outfeature_size, heads, features_embedding_size)

    pred, labels = gatcnnmf_forward(params, circ_feature_tensor, dis_feature_tensor,
                                    rel_matrix, adj, heads, outfeature_size,
                                    negative_slope)
    jax.block_until_ready(pred)
    jax.block_until_ready(labels)

    assert pred.shape == (Nc * Nd, 1)
    assert labels.shape == (Nc * Nd, 1)
    assert bool(jnp.all(jnp.isfinite(pred)))
    assert bool(jnp.all((pred >= 0.0) & (pred <= 1.0)))

    print("KERNEL_OK")
</pallas_src>

<mosaic_0001>
module attributes {stable_mosaic.version = 11 : i64} {
  func.func @kernel(%arg0: i32, %arg1: i32, %arg2: i32, %arg3: memref<32x128xbf16, #tpu.memory_space<vmem>>, %arg4: memref<128x128xbf16, #tpu.memory_space<vmem>>, %arg5: memref<1x128xf32, #tpu.memory_space<vmem>>, %arg6: memref<32x128xf32, #tpu.memory_space<vmem>>) attributes {dimension_semantics = [#tpu.dimension_semantics<parallel>, #tpu.dimension_semantics<parallel>, #tpu.dimension_semantics<arbitrary>], iteration_bounds = array<i64: 1, 1, 1>, scalar_prefetch = 0 : i64, scratch_operands = 0 : i64, tpu.core_type = #tpu.core_type<tc>, window_params = [{transform_indices = @transform_0, window_bounds = array<i64: 32, 128>}, {transform_indices = @transform_1, window_bounds = array<i64: 128, 128>}, {transform_indices = @transform_2, window_bounds = array<i64: 1, 128>}, {transform_indices = @transform_3, window_bounds = array<i64: 32, 128>}]} {
    %c0_i32 = arith.constant 0 : i32
    %0 = arith.cmpi eq, %arg2, %c0_i32 : i32
    %1 = arith.extui %0 : i1 to i32
    %c0_i32_0 = arith.constant 0 : i32
    %2 = arith.cmpi ne, %1, %c0_i32_0 : i32
    scf.if %2 {
      %cst_10 = arith.constant 0.000000e+00 : f32
      %12 = vector.broadcast %cst_10 : f32 to vector<32x128xf32>
      %c0_11 = arith.constant 0 : index
      %c0_12 = arith.constant 0 : index
      %13 = vector.load %arg6[%c0_11, %c0_12] : memref<32x128xf32, #tpu.memory_space<vmem>>, vector<32x128xf32>
      tpu.vector_store %arg6[%c0_11, %c0_12], %12 {strides = array<i32>} : memref<32x128xf32, #tpu.memory_space<vmem>>, vector<32x128xf32>,
    } else {
    }
    %c0 = arith.constant 0 : index
    %c0_1 = arith.constant 0 : index
    %3 = vector.load %arg6[%c0, %c0_1] : memref<32x128xf32, #tpu.memory_space<vmem>>, vector<32x128xf32>
    %c0_2 = arith.constant 0 : index
    %c0_3 = arith.constant 0 : index
    %4 = vector.load %arg3[%c0_2, %c0_3] : memref<32x128xbf16, #tpu.memory_space<vmem>>, vector<32x128xbf16>
    %c0_4 = arith.constant 0 : index
    %c0_5 = arith.constant 0 : index
    %5 = vector.load %arg4[%c0_4, %c0_5] : memref<128x128xbf16, #tpu.memory_space<vmem>>, vector<128x128xbf16>
    %cst = arith.constant dense<0.000000e+00> : vector<32x128xf32>
    %6 = tpu.matmul %4, %5, %cst {dimension_numbers = #tpu.dot_dimension_numbers<[1], [0], [0], [1], [0, 0, 1, 1], [], []>} : vector<32x128xbf16>, vector<128x128xbf16>, vector<32x128xf32> -> vector<32x128xf32>
    %7 = arith.addf %3, %6 : vector<32x128xf32>
    %c0_6 = arith.constant 0 : index
    %c0_7 = arith.constant 0 : index
    %8 = vector.load %arg6[%c0_6, %c0_7] : memref<32x128xf32, #tpu.memory_space<vmem>>, vector<32x128xf32>
    tpu.vector_store %arg6[%c0_6, %c0_7], %7 {strides = array<i32>} : memref<32x128xf32, #tpu.memory_space<vmem>>, vector<32x128xf32>,
    %c0_i32_8 = arith.constant 0 : i32
    %9 = arith.cmpi eq, %arg2, %c0_i32_8 : i32
    %10 = arith.extui %9 : i1 to i32
    %c0_i32_9 = arith.constant 0 : i32
    %11 = arith.cmpi ne, %10, %c0_i32_9 : i32
    scf.if %11 {
      %c0_10 = arith.constant 0 : index
      %c0_11 = arith.constant 0 : index
      %12 = vector.load %arg6[%c0_10, %c0_11] : memref<32x128xf32, #tpu.memory_space<vmem>>, vector<32x128xf32>
      %c0_12 = arith.constant 0 : index
      %c0_13 = arith.constant 0 : index
      %13 = vector.load %arg5[%c0_12, %c0_13] : memref<1x128xf32, #tpu.memory_space<vmem>>, vector<1x128xf32>
      %14 = vector.broadcast %13 : vector<1x128xf32> to vector<32x128xf32>
      %15 = arith.addf %12, %14 : vector<32x128xf32>
      %c0_14 = arith.constant 0 : index
      %c0_15 = arith.constant 0 : index
      %16 = vector.load %arg6[%c0_14, %c0_15] : memref<32x128xf32, #tpu.memory_space<vmem>>, vector<32x128xf32>
      tpu.vector_store %arg6[%c0_14, %c0_15], %15 {strides = array<i32>} : memref<32x128xf32, #tpu.memory_space<vmem>>, vector<32x128xf32>,
    } else {
    }
    return
  }
  func.func @transform_0(%arg0: i32, %arg1: i32, %arg2: i32) -> (i32, i32) {
    %c0_i32 = arith.constant 0 : i32
    return %arg0, %arg2 : i32, i32
  }
  func.func @transform_1(%arg0: i32, %arg1: i32, %arg2: i32) -> (i32, i32) {
    %c0_i32 = arith.constant 0 : i32
    return %arg2, %arg1 : i32, i32
  }
  func.func @transform_2(%arg0: i32, %arg1: i32, %arg2: i32) -> (i32, i32) {
    %c0_i32 = arith.constant 0 : i32
    %c0_i32_0 = arith.constant 0 : i32
    return %c0_i32, %arg1 : i32, i32
  }
  func.func @transform_3(%arg0: i32, %arg1: i32, %arg2: i32) -> (i32, i32) {
    %c0_i32 = arith.constant 0 : i32
    return %arg0, %arg1 : i32, i32
  }
}

</mosaic_0001>

<llo_original>
// kernel: tpu_custom_call.1
$region0: #{tpu_custom_call.1}
  #allocation0 [shape = 'u32[]', space=smem, size = 0x4, offset = 0x4, fixed_abs, tag = 'smem constant byte address 0x4 - core index']
  #allocation1 [shape = 'u32[144,128]{1,0:T(1,128)}', space=vmem, size = 0x12000, scoped, tag = 'internal scratch']
  %s0 = inlined_call_operand.hbm [shape: bf16[32,128], index: 0, kind: input, shape index: {}]
  %s1 = inlined_call_operand.hbm [shape: bf16[128,128], index: 1, kind: input, shape index: {}]
  %s2 = inlined_call_operand.vmem [shape: f32[1,128], index: 2, kind: input, shape index: {}]
  %s3 = inlined_call_operand.hbm [shape: f32[32,128], index: 3, kind: output, shape index: {}]
  %s4 = sld [smem:[#allocation0]]
  $region38: #{tpu_custom_call.1} parent=0
    _
  %s6 = ssub.s32 1, %s4
  %s7 = scalar_select 0, %s6, %s4
  $region1: #{tpu_custom_call.1} parent=0
    #allocation2 [shape = 'u8[8192]{0}', space=vmem, size = 0x2000, scoped, tag = 'input window, operand 0, single buffered']
    #allocation3 [shape = 's32[1]{0}', space=sflag, size = 0x4, scoped, tag = 'scoped memory for tpu_custom_call.1']
    #allocation4 [shape = 's32[1]{0}', space=sflag, size = 0x4, scoped, tag = 'scoped memory for tpu_custom_call.1']
    #allocation5 [shape = 'u8[32768]{0}', space=vmem, size = 0x8000, scoped, tag = 'input window, operand 1, single buffered']
    #allocation6 [shape = 's32[1]{0}', space=sflag, size = 0x4, scoped, tag = 'scoped memory for tpu_custom_call.1']
    #allocation7 [shape = 'u8[16384]{0}', space=vmem, size = 0x4000, scoped, tag = 'output window, operand 0, single buffered']
    %8 = vsyncpa [#allocation3], 0
    %9 = vsyncpa [#allocation6], 0
    %10 = vsyncpa [#allocation4], 0
    // Predicated region
    $region2: #{tpu_custom_call.1} parent=1 // pred_check
      _
    $region3: #{tpu_custom_call.1} parent=1 // pred_check_branch
      %12 = sbr.rel (0) target = $region5
    $region4: #{tpu_custom_call.1} parent=1 // pred_region
      %s14 = ssub.s32 256, 256
      %15 = vsyncadd [#allocation3], %s14
      %s16 = sshll.u32 [#allocation2], 4
      %s17 = int_to_ptr.vmem [resolvable:$true] %s16
      %22 = dma.hbm_to_vmem [thread:$0]  %s0, 256, %s17, [#allocation3], 64, 64, 4
    $region5: #{tpu_custom_call.1} parent=1 // pred_fallthru
      _
    // Predicated region
    $region6: #{tpu_custom_call.1} parent=1 // pred_check
      _
    $region7: #{tpu_custom_call.1} parent=1 // pred_check_branch
      %24 = sbr.rel (0) target = $region9
    $region8: #{tpu_custom_call.1} parent=1 // pred_region
      %s26 = ssub.s32 1024, 1024
      %27 = vsyncadd [#allocation6], %s26
      %s28 = sshll.u32 [#allocation5], 4
      %s29 = int_to_ptr.vmem [resolvable:$true] %s28
      %34 = dma.hbm_to_vmem [thread:$0]  %s1, 1024, %s29, [#allocation6], 64, 64, 4
    $region9: #{tpu_custom_call.1} parent=1 // pred_fallthru
      _
    // Predicated region
    $region10: #{tpu_custom_call.1} parent=1 // pred_check
      _
    $region11: #{tpu_custom_call.1} parent=1 // pred_check_branch
      %36 = sbr.rel (0) target = $region13
    $region12: #{tpu_custom_call.1} parent=1 // pred_region
      _
    $region13: #{tpu_custom_call.1} parent=1 // pred_fallthru
      _
    // Predicated region
    $region14: #{tpu_custom_call.1} parent=1 // pred_check
      _
    $region15: #{tpu_custom_call.1} parent=1 // pred_check_branch
      %38 = sbr.rel (0) target = $region17
    $region16: #{tpu_custom_call.1} parent=1 // pred_region
      %39 = dma.done [#allocation3], 256
    $region17: #{tpu_custom_call.1} parent=1 // pred_fallthru
      _
    // Predicated region
    $region18: #{tpu_custom_call.1} parent=1 // pred_check
      _
    $region19: #{tpu_custom_call.1} parent=1 // pred_check_branch
      %41 = sbr.rel (0) target = $region21
    $region20: #{tpu_custom_call.1} parent=1 // pred_region
      %42 = dma.done [#allocation6], 1024
    $region21: #{tpu_custom_call.1} parent=1 // pred_fallthru
      _
    %p44 = scmp.eq.s32.totalorder 0, 0
    // Predicated region
    $region22: #{tpu_custom_call.1} parent=1 // pred_check
      %p45 = pneg %p44
    $region23: #{tpu_custom_call.1} parent=1 // pred_check_branch
      %47 = sbr.rel (%p45) target = $region25
    $region24: #{tpu_custom_call.1} parent=1 // pred_region
      %48 = vst [vmem:[#allocation7] sm:$0xff] 0.0
      %49 = vst [vmem:[#allocation7 + $0x8] sm:$0xff] 0.0
      %50 = vst [vmem:[#allocation7 + $0x10] sm:$0xff] 0.0
      %51 = vst [vmem:[#allocation7 + $0x18] sm:$0xff] 0.0
    $region25: #{tpu_custom_call.1} parent=1 // pred_fallthru
      _
    %v52 = vld [vmem:[#allocation7] sm:$0xff]
    %v53 = vld [vmem:[#allocation7 + $0x8] sm:$0xff]
    %v54 = vld [vmem:[#allocation7 + $0x10] sm:$0xff]
    %v55 = vld [vmem:[#allocation7 + $0x18] sm:$0xff]
    %v56 = vld [vmem:[#allocation2] sm:$0xf]
    %v57 = vld [vmem:[#allocation2 + $0x4] sm:$0xf]
    %v58 = vld [vmem:[#allocation2 + $0x8] sm:$0xf]
    %v59 = vld [vmem:[#allocation2 + $0xc] sm:$0xf]
    %v60 = vld [vmem:[#allocation5] sm:$0xf]
    %v61 = vld [vmem:[#allocation5 + $0x4] sm:$0xf]
    %v62 = vld [vmem:[#allocation5 + $0x8] sm:$0xf]
    %v63 = vld [vmem:[#allocation5 + $0xc] sm:$0xf]
    %v64 = vld [vmem:[#allocation5 + $0x10] sm:$0xf]
    %v65 = vld [vmem:[#allocation5 + $0x14] sm:$0xf]
    %v66 = vld [vmem:[#allocation5 + $0x18] sm:$0xf]
    %v67 = vld [vmem:[#allocation5 + $0x1c] sm:$0xf]
    %v68 = vld [vmem:[#allocation5 + $0x20] sm:$0xf]
    %v69 = vld [vmem:[#allocation5 + $0x24] sm:$0xf]
    %v70 = vld [vmem:[#allocation5 + $0x28] sm:$0xf]
    %v71 = vld [vmem:[#allocation5 + $0x2c] sm:$0xf]
    %v72 = vld [vmem:[#allocation5 + $0x30] sm:$0xf]
    %v73 = vld [vmem:[#allocation5 + $0x34] sm:$0xf]
    %v74 = vld [vmem:[#allocation5 + $0x38] sm:$0xf]
    %v75 = vld [vmem:[#allocation5 + $0x3c] sm:$0xf]
    %v80 = vunpack.c.l.b16 %v56
    %v81 = vunpack.c.l.b16 %v57
    %v82 = vunpack.c.l.b16 %v58
    %v83 = vunpack.c.l.b16 %v59
    %v84 = vpack.c.b16 %v81, %v80
    %v85 = vpack.c.b16 %v83, %v82
    %v104 = vunpack.c.l.b16 %v60
    %v105 = vunpack.c.l.b16 %v61
    %v106 = vunpack.c.l.b16 %v62
    %v107 = vunpack.c.l.b16 %v63
    %v108 = vunpack.c.l.b16 %v64
    %v109 = vunpack.c.l.b16 %v65
    %v110 = vunpack.c.l.b16 %v66
    %v111 = vunpack.c.l.b16 %v67
    %v112 = vunpack.c.l.b16 %v68
    %v113 = vunpack.c.l.b16 %v69
    %v114 = vunpack.c.l.b16 %v70
    %v115 = vunpack.c.l.b16 %v71
    %v116 = vunpack.c.l.b16 %v72
    %v117 = vunpack.c.l.b16 %v73
    %v118 = vunpack.c.l.b16 %v74
    %v119 = vunpack.c.l.b16 %v75
    %v120 = vpack.c.b16 %v105, %v104
    %v121 = vpack.c.b16 %v107, %v106
    %v122 = vpack.c.b16 %v109, %v108
    %v123 = vpack.c.b16 %v111, %v110
    %v124 = vpack.c.b16 %v113, %v112
    %v125 = vpack.c.b16 %v115, %v114
    %v126 = vpack.c.b16 %v117, %v116
    %v127 = vpack.c.b16 %v119, %v118
    %136 = vmatprep.subr.bf16.mxu0 0
    %137 = vmatpush1.bf16.msra.mxu0 %v120
    %138 = vmatprep.subr.bf16.mxu0 0
    %139 = vmatpush1.bf16.msra.mxu0 %v121
    %140 = vmatprep.subr.bf16.mxu0 0
    %141 = vmatpush1.bf16.msra.mxu0 %v122
    %142 = vmatprep.subr.bf16.mxu0 0
    %143 = vmatpush1.bf16.msra.mxu0 %v123
    %144 = vmatprep.subr.bf16.mxu0 0
    %145 = vmatpush1.bf16.msra.mxu0 %v124
    %146 = vmatprep.subr.bf16.mxu0 0
    %147 = vmatpush1.bf16.msra.mxu0 %v125
    %148 = vmatprep.subr.bf16.mxu0 0
    %149 = vmatpush1.bf16.msra.mxu0 %v126
    %150 = vmatprep.subr.bf16.mxu0 0
    %151 = vmatpush1.bf16.msra.mxu0 %v127
    %152 = vmatprep.subr.bf16.mxu0 0
    %153 = vmatpush1.bf16.msra.mxu0 0
    %154 = vmatprep.subr.bf16.mxu0 0
    %155 = vmatpush1.bf16.msra.mxu0 0
    %156 = vmatprep.subr.bf16.mxu0 0
    %157 = vmatpush1.bf16.msra.mxu0 0
    %158 = vmatprep.subr.bf16.mxu0 0
    %159 = vmatpush1.bf16.msra.mxu0 0
    %160 = vmatprep.subr.bf16.mxu0 0
    %161 = vmatpush1.bf16.msra.mxu0 0
    %162 = vmatprep.subr.bf16.mxu0 0
    %163 = vmatpush1.bf16.msra.mxu0 0
    %164 = vmatprep.subr.bf16.mxu0 0
    %165 = vmatpush1.bf16.msra.mxu0 0
    %166 = vmatprep.subr.bf16.mxu0 0
    %167 = vmatpush1.bf16.msra.mxu0 0
    %168 = vmatprep.mubr.bf16.mxu0 0
    %169 = vmatmul.mubr.bf16.gmra.mrb[0].mxu0 %v84
    %v170 = vpop.f32.mrb[0].mxu0
    %v171 = vadd.f32 0.0, %v170
    %v172 = vpop.f32.mrb[0].mxu0
    %v173 = vpop.f32.mrb[0].mxu0
    %v174 = vadd.f32 0.0, %v173
    %v175 = vpop.f32.mrb[0].mxu0
    %176 = vmatprep.mubr.bf16.mxu0 0
    %177 = vmatmul.mubr.bf16.gmra.mrb[0].mxu0 %v85
    %v178 = vpop.f32.mrb[0].mxu0
    %v179 = vadd.f32 0.0, %v178
    %v180 = vpop.f32.mrb[0].mxu0
    %v181 = vpop.f32.mrb[0].mxu0
    %v182 = vadd.f32 0.0, %v181
    %v183 = vpop.f32.mrb[0].mxu0
    %184 = vdwg.mxu0
    %v185 = vadd.f32 %v52, %v171
    %v186 = vadd.f32 %v53, %v174
    %v187 = vadd.f32 %v54, %v179
    %v188 = vadd.f32 %v55, %v182
    %189 = vst [vmem:[#allocation7] sm:$0xff] %v185
    %190 = vst [vmem:[#allocation7 + $0x8] sm:$0xff] %v186
    %191 = vst [vmem:[#allocation7 + $0x10] sm:$0xff] %v187
    %192 = vst [vmem:[#allocation7 + $0x18] sm:$0xff] %v188
    // Predicated region
    $region26: #{tpu_custom_call.1} parent=1 // pred_check
      %p193 = pneg %p44
    $region27: #{tpu_custom_call.1} parent=1 // pred_check_branch
      %195 = sbr.rel (%p193) target = $region29
    $region28: #{tpu_custom_call.1} parent=1 // pred_region
      %v196 = vld [vmem:[#allocation7] sm:$0xff]
      %v197 = vld [vmem:[#allocation7 + $0x8] sm:$0xff]
      %v198 = vld [vmem:[#allocation7 + $0x10] sm:$0xff]
      %v199 = vld [vmem:[#allocation7 + $0x18] sm:$0xff]
      %v200 = vld [vmem:[%s2] sm:$0x1]
      %v202 = vlaneseq
      %v203 = vshrl.u32 %v202, 7
      %v204 = vsub.s32 0, %v203
      %v205 = vrot.slane %v200, %v204
      %v207 = vadd.f32 %v196, %v205
      %v208 = vadd.f32 %v197, %v205
      %v209 = vadd.f32 %v198, %v205
      %v210 = vadd.f32 %v199, %v205
      %211 = vst [vmem:[#allocation7] sm:$0xff] %v207
      %212 = vst [vmem:[#allocation7 + $0x8] sm:$0xff] %v208
      %213 = vst [vmem:[#allocation7 + $0x10] sm:$0xff] %v209
      %214 = vst [vmem:[#allocation7 + $0x18] sm:$0xff] %v210
    $region29: #{tpu_custom_call.1} parent=1 // pred_fallthru
      _
    // Predicated region
    $region30: #{tpu_custom_call.1} parent=1 // pred_check
      _
    $region31: #{tpu_custom_call.1} parent=1 // pred_check_branch
      %216 = sbr.rel (0) target = $region33
    $region32: #{tpu_custom_call.1} parent=1 // pred_region
      %s218 = ssub.s32 512, 512
      %219 = vsyncadd [#allocation4], %s218
      %s220 = sshll.u32 [#allocation7], 4
      %s221 = int_to_ptr.vmem [resolvable:$true] %s220
      %226 = dma.vmem_to_hbm [thread:$0]  %s221, 512, %s3, [#allocation4], 128, 128, 8
    $region33: #{tpu_custom_call.1} parent=1 // pred_fallthru
      _
    // Predicated region
    $region34: #{tpu_custom_call.1} parent=1 // pred_check
      _
    $region35: #{tpu_custom_call.1} parent=1 // pred_check_branch
      %228 = sbr.rel (0) target = $region37
    $region36: #{tpu_custom_call.1} parent=1 // pred_region
      %229 = dma.done [#allocation4], 512
    $region37: #{tpu_custom_call.1} parent=1 // pred_fallthru
      _
    %230 = vsyncpa [#allocation3], 1
    %231 = vsyncpa [#allocation6], 1
    %232 = vsyncpa [#allocation4], 1

</llo_original>
